<compile_context>
chip_gen: v6e
topology: v6e:2x2x1
jax: 0.10.0
libtpu: 0.0.40
codegen_flags: <defaults>
</compile_context>

<pallas_src>
import jax
import jax.numpy as jnp
from jax.experimental import pallas as pl
from jax.experimental.pallas import tpu as pltpu


def _round_up(x, m):
    return ((x + m - 1) // m) * m


# --------------------------------------------------------------------------
# Kernel 1: projection table  proj[v] = emb[v] @ W_cat + b_cat   (V_pad, 8H)
# --------------------------------------------------------------------------
def _proj_table_kernel(emb_ref, w_ref, b_ref, out_ref):
    out_ref[...] = (jnp.dot(emb_ref[...], w_ref[...],
                            preferred_element_type=jnp.float32)
                    + b_ref[...]).astype(out_ref.dtype)


def _project_table(emb_pad, w_cat, b_cat, tv):
    V_pad, E = emb_pad.shape
    G = w_cat.shape[1]
    grid_spec = pltpu.PrefetchScalarGridSpec(
        num_scalar_prefetch=0,
        grid=(V_pad // tv,),
        in_specs=[
            pl.BlockSpec((tv, E), lambda v: (v, 0)),
            pl.BlockSpec((E, G), lambda v: (0, 0)),
            pl.BlockSpec((1, G), lambda v: (0, 0)),
        ],
        out_specs=pl.BlockSpec((tv, G), lambda v: (v, 0)),
    )
    return pl.pallas_call(
        _proj_table_kernel,
        grid_spec=grid_spec,
        out_shape=jax.ShapeDtypeStruct((V_pad, G), jnp.float32),
        compiler_params=pltpu.CompilerParams(
            dimension_semantics=("parallel",)),
    )(emb_pad, w_cat, b_cat)


# --------------------------------------------------------------------------
# Kernel 2: token-tiled row gather from the projection table (HBM -> VMEM)
# --------------------------------------------------------------------------
_RING = 8          # fixed DMA-semaphore ring depth (outstanding row gathers)


def _gather_kernel(idx_ref, tab_ref, out_ref, sems):
    m = pl.program_id(0)
    tm = out_ref.shape[0]
    base = m * tm

    def row_copy(k):
        row = idx_ref[base + k]
        return pltpu.make_async_copy(tab_ref.at[pl.ds(row, 1)],   # (1, 8H) in HBM
                                     out_ref.at[pl.ds(k, 1)],     # (1, 8H) in VMEM
                                     sems.at[k % _RING])

    # Prime the ring (small static unroll).
    for k in range(min(_RING, tm)):
        row_copy(k).start()

    @pl.loop(0, tm)
    def _(k):
        row_copy(k).wait()

        @pl.when(k + _RING < tm)
        def _():
            row_copy(k + _RING).start()


def _gather_rows(idx_pad, proj_table, tm):
    N_pad = idx_pad.shape[0]
    G = proj_table.shape[1]
    grid_spec = pltpu.PrefetchScalarGridSpec(
        num_scalar_prefetch=1,                         # token ids -> SMEM
        grid=(N_pad // tm,),
        in_specs=[pl.BlockSpec(memory_space=pl.ANY)],  # proj_table stays in HBM
        out_specs=pl.BlockSpec((tm, G), lambda m, idx: (m, 0)),
        scratch_shapes=[pltpu.SemaphoreType.DMA((_RING,))],
    )
    return pl.pallas_call(
        _gather_kernel,
        grid_spec=grid_spec,
        out_shape=jax.ShapeDtypeStruct((N_pad, G), jnp.float32),
        compiler_params=pltpu.CompilerParams(
            dimension_semantics=("parallel",)),
    )(idx_pad, proj_table)


# --------------------------------------------------------------------------
# Kernel 3: bidirectional LSTM recurrence, T timesteps per grid step,
#           both directions fused into one block-diag matmul per step.
# --------------------------------------------------------------------------
def _bilstm_kernel(x_ref, whh_ref, out_ref, hn_ref, cn_ref, h_scr, c_scr):
    j = pl.program_id(0)
    nj = pl.num_programs(0)
    T = x_ref.shape[0]
    H2 = h_scr.shape[-1]          # 2H: lanes [forward H | backward H]
    H = H2 // 2

    @pl.when(j == 0)
    def _():
        h_scr[...] = jnp.zeros_like(h_scr)
        c_scr[...] = jnp.zeros_like(c_scr)

    whh = whh_ref[...]            # (2H, 8H) block-diag, resident across grid

    def step(t, carry):
        h_cat, c_cat = carry
        # x_ref[t] already holds x@W_ih^T + b_ih + b_hh for both directions in
        # per-gate interleaved layout: [i_f i_b | f_f f_b | g_f g_b | o_f o_b].
        gates = x_ref[t] + jnp.dot(h_cat, whh,
                                   preferred_element_type=jnp.float32)
        i = jax.nn.sigmoid(gates[:, 0 * H2:1 * H2])
        f = jax.nn.sigmoid(gates[:, 1 * H2:2 * H2])
        g = jnp.tanh(gates[:, 2 * H2:3 * H2])
        o = jax.nn.sigmoid(gates[:, 3 * H2:4 * H2])
        c_new = f * c_cat + i * g
        h_new = o * jnp.tanh(c_new)
        out_ref[t] = h_new.astype(out_ref.dtype)     # single (B, 2H) lane-dense store
        return h_new, c_new

    h_cat, c_cat = jax.lax.fori_loop(0, T, step, (h_scr[...], c_scr[...]),
                                     unroll=True)
    h_scr[...] = h_cat
    c_scr[...] = c_cat

    @pl.when(j == nj - 1)
    def _():
        hn_ref[0] = h_cat[:, :H].astype(hn_ref.dtype)   # forward final state
        hn_ref[1] = h_cat[:, H:].astype(hn_ref.dtype)   # backward final state
        cn_ref[0] = c_cat[:, :H].astype(cn_ref.dtype)
        cn_ref[1] = c_cat[:, H:].astype(cn_ref.dtype)


def _bilstm_scan(x_loop, whh_cat, t_chunk):
    """x_loop: (S, B, 8H) loop-order gate inputs (fwd lanes = time t, bwd lanes
    = time S-1-t).  Returns (out_loop (S,B,2H), h_n (2,B,H), c_n (2,B,H))."""
    S, B, G = x_loop.shape
    H2 = whh_cat.shape[0]
    H = H2 // 2
    grid_spec = pltpu.PrefetchScalarGridSpec(
        num_scalar_prefetch=0,
        grid=(S // t_chunk,),
        in_specs=[
            pl.BlockSpec((t_chunk, B, G), lambda j: (j, 0, 0)),
            pl.BlockSpec((H2, G), lambda j: (0, 0)),
        ],
        out_specs=[
            pl.BlockSpec((t_chunk, B, H2), lambda j: (j, 0, 0)),
            pl.BlockSpec((2, B, H), lambda j: (0, 0, 0)),
            pl.BlockSpec((2, B, H), lambda j: (0, 0, 0)),
        ],
        scratch_shapes=[pltpu.VMEM((B, H2), jnp.float32),
                        pltpu.VMEM((B, H2), jnp.float32)],
    )
    return pl.pallas_call(
        _bilstm_kernel,
        grid_spec=grid_spec,
        out_shape=(
            jax.ShapeDtypeStruct((S, B, H2), jnp.float32),
            jax.ShapeDtypeStruct((2, B, H), jnp.float32),
            jax.ShapeDtypeStruct((2, B, H), jnp.float32),
        ),
        compiler_params=pltpu.CompilerParams(
            dimension_semantics=("arbitrary",)),   # true sequential recurrence
    )(x_loop, whh_cat)


# --------------------------------------------------------------------------
# Weight packing: per-gate interleaved layout across directions
#   columns: [i_f i_b | f_f f_b | g_f g_b | o_f o_b], each block H wide.
# --------------------------------------------------------------------------
def _pack_weights(p, H):
    def gcols(wt, g):                       # gate-g columns of a transposed weight
        return wt[:, g * H:(g + 1) * H]

    wihf_t, wihb_t = p["Wih_f"].T, p["Wih_b"].T     # (E, 4H)
    whhf_t, whhb_t = p["Whh_f"].T, p["Whh_b"].T     # (H, 4H)
    bf = p["bih_f"] + p["bhh_f"]
    bb = p["bih_b"] + p["bhh_b"]

    w_cat = jnp.concatenate(
        [jnp.concatenate([gcols(wihf_t, g), gcols(wihb_t, g)], axis=1)
         for g in range(4)], axis=1)                               # (E, 8H)
    b_cat = jnp.concatenate(
        [jnp.concatenate([bf[g * H:(g + 1) * H], bb[g * H:(g + 1) * H]])
         for g in range(4)]).reshape(1, 8 * H)                     # (1, 8H)

    z = jnp.zeros((H, H), jnp.float32)
    whh_cat = jnp.concatenate(
        [jnp.concatenate(
            [jnp.concatenate([gcols(whhf_t, g), z], axis=1),       # rows [:H]  -> fwd
             jnp.concatenate([z, gcols(whhb_t, g)], axis=1)],      # rows [H:]  -> bwd
            axis=0)
         for g in range(4)], axis=1)                               # (2H, 8H)
    return w_cat, b_cat, whh_cat


# --------------------------------------------------------------------------
# Encoder forward (wrapper)
# --------------------------------------------------------------------------
def encoder_forward(X, emb_table, p):
    """X: (B, S) int32 token ids.
    Returns (output (B,S,2H), hidden (2,B,H), cell (2,B,H))."""
    B, S = X.shape
    V, E = emb_table.shape
    H = p["Whh_f"].shape[1]
    G = 8 * H

    w_cat, b_cat, whh_cat = _pack_weights(p, H)

    # 1) projection table over the vocab (tiled, "parallel").
    tv = min(512, _round_up(V, 8))
    v_pad = _round_up(V, tv)
    emb_pad = jnp.pad(emb_table.astype(jnp.float32), ((0, v_pad - V), (0, 0)))
    proj_table = _project_table(emb_pad, w_cat, b_cat, tv)          # (V_pad, 8H)

    # 2) token-tiled row gather (time-major flat order, padded to a TM multiple).
    idx_flat = X.T.reshape(-1).astype(jnp.int32)                    # (S*B,)
    N = idx_flat.shape[0]
    tm = min(256, _round_up(N, 8))
    n_pad = _round_up(N, tm)
    idx_pad = jnp.pad(idx_flat, (0, n_pad - N))                     # pad with id 0
    x_flat = _gather_rows(idx_pad, proj_table, tm)                  # (N_pad, 8H)
    x_proj = x_flat[:N].reshape(S, B, G)                            # time-major

    # Build the loop-order stream once in XLA: forward lanes keep time t,
    # backward lanes take time S-1-t (even/odd H-blocks of the interleaved layout).
    lane = jax.lax.broadcasted_iota(jnp.int32, (1, 1, G), 2)
    fwd_mask = ((lane // H) % 2) == 0
    x_loop = jnp.where(fwd_mask, x_proj, jnp.flip(x_proj, axis=0))

    # 3) recurrence, T timesteps per grid step.
    t_chunk = next(t for t in (16, 8, 4, 2, 1) if S % t == 0)
    out_loop, h_n, c_n = _bilstm_scan(x_loop, whh_cat, t_chunk)

    # Glue: un-reverse the backward half and go back to batch_first (B, S, 2H).
    out_f = out_loop[:, :, :H]
    out_b = jnp.flip(out_loop[:, :, H:], axis=0)
    output = jnp.transpose(jnp.concatenate([out_f, out_b], axis=-1), (1, 0, 2))
    return output, h_n, c_n


# --------------------------------------------------------------------------
# Parameters / pure-JAX reference
# --------------------------------------------------------------------------
def init_lstm_params(key, input_dim, hidden_dim):
    """PyTorch nn.LSTM-shaped params: W_ih (4H,E), W_hh (4H,H), b (4H,), x2 dirs."""
    ks = jax.random.split(key, 8)
    bound = 1.0 / jnp.sqrt(hidden_dim)
    u = lambda k, shape: jax.random.uniform(k, shape, jnp.float32, -bound, bound)
    H4 = 4 * hidden_dim
    return {
        "Wih_f": u(ks[0], (H4, input_dim)),
        "Whh_f": u(ks[1], (H4, hidden_dim)),
        "bih_f": u(ks[2], (H4,)),
        "bhh_f": u(ks[3], (H4,)),
        "Wih_b": u(ks[4], (H4, input_dim)),
        "Whh_b": u(ks[5], (H4, hidden_dim)),
        "bih_b": u(ks[6], (H4,)),
        "bhh_b": u(ks[7], (H4,)),
    }


def _reference(X, emb_table, p):
    H = p["Whh_f"].shape[1]
    emb = emb_table[X]                      # (B, S, E)
    B, S, _ = emb.shape
    hi = jax.lax.Precision.HIGHEST

    def cell(x, h, c, Wih, Whh, bih, bhh):
        gates = (jnp.dot(x, Wih.T, precision=hi) + bih
                 + jnp.dot(h, Whh.T, precision=hi) + bhh)
        i, f, g, o = jnp.split(gates, 4, axis=-1)
        c_new = jax.nn.sigmoid(f) * c + jax.nn.sigmoid(i) * jnp.tanh(g)
        h_new = jax.nn.sigmoid(o) * jnp.tanh(c_new)
        return h_new, c_new

    h = jnp.zeros((B, H), jnp.float32)
    c = jnp.zeros((B, H), jnp.float32)
    outs_f = []
    for t in range(S):
        h, c = cell(emb[:, t], h, c, p["Wih_f"], p["Whh_f"], p["bih_f"], p["bhh_f"])
        outs_f.append(h)
    hf, cf = h, c

    h = jnp.zeros((B, H), jnp.float32)
    c = jnp.zeros((B, H), jnp.float32)
    outs_b = [None] * S
    for t in range(S - 1, -1, -1):
        h, c = cell(emb[:, t], h, c, p["Wih_b"], p["Whh_b"], p["bih_b"], p["bhh_b"])
        outs_b[t] = h
    hb, cb = h, c

    output = jnp.concatenate([jnp.stack(outs_f, axis=1),
                              jnp.stack(outs_b, axis=1)], axis=-1)      # (B,S,2H)
    hidden = jnp.stack([hf, hb], axis=0)                                # (2,B,H)
    cell_s = jnp.stack([cf, cb], axis=0)                                # (2,B,H)
    return output, hidden, cell_s


if __name__ == "__main__":
    B, S = 2, 8
    V, E, H = 50, 32, 32     # vocab, input_dim (= embedding dim), hidden_dim

    key = jax.random.PRNGKey(0)
    k_emb, k_idx, k_p = jax.random.split(key, 3)

    embeddings = jax.random.normal(k_emb, (V, E), jnp.float32)
    embeddings = embeddings.at[0].set(0.0)          # padding_idx=0 row
    X = jax.random.randint(k_idx, (B, S), 0, V, dtype=jnp.int32)
    X = X.at[0, 0].set(0)                           # exercise the padding index
    params = init_lstm_params(k_p, E, H)

    output, hidden, cell = encoder_forward(X, embeddings, params)
    jax.block_until_ready((output, hidden, cell))

    out_ref, h_ref, c_ref = _reference(X, embeddings, params)
    assert output.shape == (B, S, 2 * H)
    assert hidden.shape == (2, B, H) and cell.shape == (2, B, H)
    assert jnp.allclose(output, out_ref, atol=1e-4, rtol=1e-3), "output mismatch"
    assert jnp.allclose(hidden, h_ref, atol=1e-4, rtol=1e-3), "hidden mismatch"
    assert jnp.allclose(cell, c_ref, atol=1e-4, rtol=1e-3), "cell mismatch"

    print("KERNEL_OK")
</pallas_src>

<mosaic_0001>
module attributes {stable_mosaic.version = 11 : i64} {
  func.func @_proj_table_kernel(%arg0: i32, %arg1: memref<56x32xf32, #tpu.memory_space<vmem>>, %arg2: memref<32x256xf32, #tpu.memory_space<vmem>>, %arg3: memref<1x256xf32, #tpu.memory_space<vmem>>, %arg4: memref<56x256xf32, #tpu.memory_space<vmem>>) attributes {dimension_semantics = [#tpu.dimension_semantics<parallel>], iteration_bounds = array<i64: 1>, scalar_prefetch = 0 : i64, scratch_operands = 0 : i64, tpu.core_type = #tpu.core_type<tc>, window_params = [{transform_indices = @transform_0, window_bounds = array<i64: 56, 32>}, {pipeline_mode = #tpu.pipeline_mode<synchronous>, transform_indices = @transform_1, window_bounds = array<i64: 32, 256>}, {pipeline_mode = #tpu.pipeline_mode<synchronous>, transform_indices = @transform_2, window_bounds = array<i64: 1, 256>}, {transform_indices = @transform_3, window_bounds = array<i64: 56, 256>}]} {
    %c0 = arith.constant 0 : index
    %c0_0 = arith.constant 0 : index
    %0 = vector.load %arg1[%c0, %c0_0] : memref<56x32xf32, #tpu.memory_space<vmem>>, vector<56x32xf32>
    %c0_1 = arith.constant 0 : index
    %c0_2 = arith.constant 0 : index
    %1 = vector.load %arg2[%c0_1, %c0_2] : memref<32x256xf32, #tpu.memory_space<vmem>>, vector<32x256xf32>
    %cst = arith.constant dense<0.000000e+00> : vector<56x256xf32>
    %2 = tpu.matmul %0, %1, %cst {dimension_numbers = #tpu.dot_dimension_numbers<[1], [0], [0], [1], [0, 0, 1, 1], [], []>} : vector<56x32xf32>, vector<32x256xf32>, vector<56x256xf32> -> vector<56x256xf32>
    %c0_3 = arith.constant 0 : index
    %c0_4 = arith.constant 0 : index
    %3 = vector.load %arg3[%c0_3, %c0_4] : memref<1x256xf32, #tpu.memory_space<vmem>>, vector<1x256xf32>
    %4 = vector.broadcast %3 : vector<1x256xf32> to vector<56x256xf32>
    %5 = arith.addf %2, %4 : vector<56x256xf32>
    %c0_5 = arith.constant 0 : index
    %c0_6 = arith.constant 0 : index
    %6 = vector.load %arg4[%c0_5, %c0_6] : memref<56x256xf32, #tpu.memory_space<vmem>>, vector<56x256xf32>
    tpu.vector_store %arg4[%c0_5, %c0_6], %5 {strides = array<i32>} : memref<56x256xf32, #tpu.memory_space<vmem>>, vector<56x256xf32>,
    return
  }
  func.func @transform_0(%arg0: i32) -> (i32, i32) {
    %c0_i32 = arith.constant 0 : i32
    %c0_i32_0 = arith.constant 0 : i32
    return %arg0, %c0_i32 : i32, i32
  }
  func.func @transform_1(%arg0: i32) -> (i32, i32) {
    %c0_i32 = arith.constant 0 : i32
    %c0_i32_0 = arith.constant 0 : i32
    %c0_i32_1 = arith.constant 0 : i32
    return %c0_i32, %c0_i32_0 : i32, i32
  }
  func.func @transform_2(%arg0: i32) -> (i32, i32) {
    %c0_i32 = arith.constant 0 : i32
    %c0_i32_0 = arith.constant 0 : i32
    %c0_i32_1 = arith.constant 0 : i32
    return %c0_i32, %c0_i32_0 : i32, i32
  }
  func.func @transform_3(%arg0: i32) -> (i32, i32) {
    %c0_i32 = arith.constant 0 : i32
    %c0_i32_0 = arith.constant 0 : i32
    return %arg0, %c0_i32 : i32, i32
  }
}

</mosaic_0001>

<llo_original>
// kernel: tpu_custom_call.1
$region0: #{tpu_custom_call.1}
  #allocation0 [shape = 'u32[]', space=smem, size = 0x4, offset = 0x4, fixed_abs, tag = 'smem constant byte address 0x4 - core index']
  #allocation1 [shape = 'u32[144,128]{1,0:T(1,128)}', space=vmem, size = 0x12000, scoped, tag = 'internal scratch']
  %s0 = inlined_call_operand.vmem [shape: f32[56,32], index: 0, kind: input, shape index: {}]
  %s1 = inlined_call_operand.vmem [shape: f32[32,256], index: 1, kind: input, shape index: {}]
  %s2 = inlined_call_operand.vmem [shape: f32[1,256], index: 2, kind: input, shape index: {}]
  %s3 = inlined_call_operand.hbm [shape: f32[56,256], index: 3, kind: output, shape index: {}]
  %s4 = sld [smem:[#allocation0]]
  $region22: #{tpu_custom_call.1} parent=0
    _
  %s6 = ssub.s32 1, %s4
  %s7 = scalar_select 0, %s6, %s4
  $region1: #{tpu_custom_call.1} parent=0
    #allocation2 [shape = 'u8[57344]{0}', space=vmem, size = 0xe000, scoped, tag = 'output window, operand 0, single buffered']
    #allocation3 [shape = 's32[1]{0}', space=sflag, size = 0x4, scoped, tag = 'scoped memory for tpu_custom_call.1']
    %8 = vsyncpa [#allocation3], 0
    // Predicated region
    $region2: #{tpu_custom_call.1} parent=1 // pred_check
      _
    $region3: #{tpu_custom_call.1} parent=1 // pred_check_branch
      %10 = sbr.rel (0) target = $region5
    $region4: #{tpu_custom_call.1} parent=1 // pred_region
      _
    $region5: #{tpu_custom_call.1} parent=1 // pred_fallthru
      _
    // Predicated region
    $region6: #{tpu_custom_call.1} parent=1 // pred_check
      _
    $region7: #{tpu_custom_call.1} parent=1 // pred_check_branch
      %12 = sbr.rel (0) target = $region9
    $region8: #{tpu_custom_call.1} parent=1 // pred_region
      _
    $region9: #{tpu_custom_call.1} parent=1 // pred_fallthru
      _
    // Predicated region
    $region10: #{tpu_custom_call.1} parent=1 // pred_check
      _
    $region11: #{tpu_custom_call.1} parent=1 // pred_check_branch
      %14 = sbr.rel (0) target = $region13
    $region12: #{tpu_custom_call.1} parent=1 // pred_region
      _
    $region13: #{tpu_custom_call.1} parent=1 // pred_fallthru
      _
    %v15 = vld [vmem:[%s0] sm:$0xff]
    %v16 = vld [vmem:[%s0 + $0x8] sm:$0xff]
    %v17 = vld [vmem:[%s0 + $0x10] sm:$0xff]
    %v18 = vld [vmem:[%s0 + $0x18] sm:$0xff]
    %v19 = vld [vmem:[%s0 + $0x20] sm:$0xff]
    %v20 = vld [vmem:[%s0 + $0x28] sm:$0xff]
    %v21 = vld [vmem:[%s0 + $0x30] sm:$0xff]
    %v22 = vld [vmem:[%s1] sm:$0xff]
    %v23 = vld [vmem:[%s1 + $0x8] sm:$0xff]
    %v24 = vld [vmem:[%s1 + $0x10] sm:$0xff]
    %v25 = vld [vmem:[%s1 + $0x18] sm:$0xff]
    %v26 = vld [vmem:[%s1 + $0x20] sm:$0xff]
    %v27 = vld [vmem:[%s1 + $0x28] sm:$0xff]
    %v28 = vld [vmem:[%s1 + $0x30] sm:$0xff]
    %v29 = vld [vmem:[%s1 + $0x38] sm:$0xff]
    %v30 = vld [vmem:[%s2] sm:$0x3]
    %v32 = vlaneseq
    %v33 = vshrl.u32 %v32, 7
    %v34 = vsub.s32 0, %v33
    %v35 = vrot.slane %v30, %v34
    %v36 = vlaneseq
    %v37 = vshrl.u32 %v36, 7
    %v38 = vsub.s32 1, %v37
    %v39 = vrot.slane %v30, %v38
    %vm42 = vcmask 261120
    %v44 = vsel %vm42, %v15, 0
    %v47 = vsel %vm42, %v16, 0
    %v50 = vsel %vm42, %v17, 0
    %v53 = vsel %vm42, %v18, 0
    %v56 = vsel %vm42, %v19, 0
    %v59 = vsel %vm42, %v20, 0
    %v62 = vsel %vm42, %v21, 0
    %64 = vmatprep.subr.mxu0 0.0
    %65 = vmatpush1.msra.mxu0 0.0
    %66 = vmatprep.subr.mxu0 0.0
    %67 = vmatpush1.msra.mxu0 0.0
    %68 = vmatprep.subr.mxu0 0.0
    %69 = vmatpush1.msra.mxu0 0.0
    %70 = vmatprep.subr.mxu0 0.0
    %71 = vmatpush1.msra.mxu0 0.0
    %72 = vmatprep.subr.mxu0 0.0
    %73 = vmatpush1.msra.mxu0 0.0
    %74 = vmatprep.subr.mxu0 0.0
    %75 = vmatpush1.msra.mxu0 0.0
    %76 = vmatprep.subr.mxu0 0.0
    %77 = vmatpush1.msra.mxu0 0.0
    %78 = vmatprep.subr.mxu0 0.0
    %79 = vmatpush1.msra.mxu0 0.0
    %80 = vmatprep.subr.mxu0 0.0
    %81 = vmatpush1.msra.mxu0 0.0
    %82 = vmatprep.subr.mxu0 0.0
    %83 = vmatpush1.msra.mxu0 0.0
    %84 = vmatprep.subr.mxu0 0.0
    %85 = vmatpush1.msra.mxu0 0.0
    %86 = vmatprep.subr.mxu0 0.0
    %87 = vmatpush1.msra.mxu0 0.0
    %88 = vmatprep.subr.mxu0 %v29
    %89 = vmatpush1.msra.mxu0 %v28
    %90 = vmatprep.subr.mxu0 %v27
    %91 = vmatpush1.msra.mxu0 %v26
    %92 = vmatprep.subr.mxu0 %v25
    %93 = vmatpush1.msra.mxu0 %v24
    %94 = vmatprep.subr.mxu0 %v23
    %95 = vmatpush1.msra.mxu0 %v22
    %96 = vmatprep.subr.mxu0 0.0
    %97 = vmatpush2.msra.mxu0 0.0
    %98 = vmatprep.subr.mxu0 0.0
    %99 = vmatpush2.msra.mxu0 0.0
    %100 = vmatprep.subr.mxu0 0.0
    %101 = vmatpush2.msra.mxu0 0.0
    %102 = vmatprep.subr.mxu0 0.0
    %103 = vmatpush2.msra.mxu0 0.0
    %104 = vmatprep.subr.mxu0 0.0
    %105 = vmatpush2.msra.mxu0 0.0
    %106 = vmatprep.subr.mxu0 0.0
    %107 = vmatpush2.msra.mxu0 0.0
    %108 = vmatprep.subr.mxu0 0.0
    %109 = vmatpush2.msra.mxu0 0.0
    %110 = vmatprep.subr.mxu0 0.0
    %111 = vmatpush2.msra.mxu0 0.0
    %112 = vmatprep.subr.mxu0 0.0
    %113 = vmatpush2.msra.mxu0 0.0
    %114 = vmatprep.subr.mxu0 0.0
    %115 = vmatpush2.msra.mxu0 0.0
    %116 = vmatprep.subr.mxu0 0.0
    %117 = vmatpush2.msra.mxu0 0.0
    %118 = vmatprep.subr.mxu0 0.0
    %119 = vmatpush2.msra.mxu0 0.0
    %120 = vmatprep.subr.mxu0 0.0
    %121 = vmatpush2.msra.mxu0 0.0
    %122 = vmatprep.subr.mxu0 0.0
    %123 = vmatpush2.msra.mxu0 0.0
    %124 = vmatprep.subr.mxu0 0.0
    %125 = vmatpush2.msra.mxu0 0.0
    %126 = vmatprep.subr.mxu0 0.0
    %127 = vmatpush2.msra.mxu0 0.0
    %128 = vmatprep.mubr.f32.mxu0 0.0
    %129 = vmatmul.mubr.f32.gmra.mxu0 %v44
    %v130 = vpop.f32.mrf.mxu0
    %v131 = vadd.f32 %v35, %v130
    %v132 = vpop.f32.mrf.mxu0
    %v133 = vadd.f32 %v39, %v132
    %134 = vmatprep.mubr.f32.mxu0 0.0
    %135 = vmatmul.mubr.f32.gmra.mxu0 %v47
    %v136 = vpop.f32.mrf.mxu0
    %v137 = vadd.f32 %v35, %v136
    %v138 = vpop.f32.mrf.mxu0
    %v139 = vadd.f32 %v39, %v138
    %140 = vmatprep.mubr.f32.mxu0 0.0
    %141 = vmatmul.mubr.f32.gmra.mxu0 %v50
    %v142 = vpop.f32.mrf.mxu0
    %v143 = vadd.f32 %v35, %v142
    %v144 = vpop.f32.mrf.mxu0
    %v145 = vadd.f32 %v39, %v144
    %146 = vmatprep.mubr.f32.mxu0 0.0
    %147 = vmatmul.mubr.f32.gmra.mxu0 %v53
    %v148 = vpop.f32.mrf.mxu0
    %v149 = vadd.f32 %v35, %v148
    %v150 = vpop.f32.mrf.mxu0
    %v151 = vadd.f32 %v39, %v150
    %152 = vmatprep.mubr.f32.mxu0 0.0
    %153 = vmatmul.mubr.f32.gmra.mxu0 %v56
    %v154 = vpop.f32.mrf.mxu0
    %v155 = vadd.f32 %v35, %v154
    %v156 = vpop.f32.mrf.mxu0
    %v157 = vadd.f32 %v39, %v156
    %158 = vmatprep.mubr.f32.mxu0 0.0
    %159 = vmatmul.mubr.f32.gmra.mxu0 %v59
    %v160 = vpop.f32.mrf.mxu0
    %v161 = vadd.f32 %v35, %v160
    %v162 = vpop.f32.mrf.mxu0
    %v163 = vadd.f32 %v39, %v162
    %164 = vmatprep.mubr.f32.mxu0 0.0
    %165 = vmatmul.mubr.f32.gmra.mxu0 %v62
    %v166 = vpop.f32.mrf.mxu0
    %v167 = vadd.f32 %v35, %v166
    %v168 = vpop.f32.mrf.mxu0
    %v169 = vadd.f32 %v39, %v168
    %170 = vdwg.mxu0
    %171 = vst [vmem:[#allocation2] sm:$0xff] %v131
    %172 = vst [vmem:[#allocation2 + $0x8] sm:$0xff] %v133
    %173 = vst [vmem:[#allocation2 + $0x10] sm:$0xff] %v137
    %174 = vst [vmem:[#allocation2 + $0x18] sm:$0xff] %v139
    %175 = vst [vmem:[#allocation2 + $0x20] sm:$0xff] %v143
    %176 = vst [vmem:[#allocation2 + $0x28] sm:$0xff] %v145
    %177 = vst [vmem:[#allocation2 + $0x30] sm:$0xff] %v149
    %178 = vst [vmem:[#allocation2 + $0x38] sm:$0xff] %v151
    %179 = vst [vmem:[#allocation2 + $0x40] sm:$0xff] %v155
    %180 = vst [vmem:[#allocation2 + $0x48] sm:$0xff] %v157
    %181 = vst [vmem:[#allocation2 + $0x50] sm:$0xff] %v161
    %182 = vst [vmem:[#allocation2 + $0x58] sm:$0xff] %v163
    %183 = vst [vmem:[#allocation2 + $0x60] sm:$0xff] %v167
    %184 = vst [vmem:[#allocation2 + $0x68] sm:$0xff] %v169
    // Predicated region
    $region14: #{tpu_custom_call.1} parent=1 // pred_check
      _
    $region15: #{tpu_custom_call.1} parent=1 // pred_check_branch
      %186 = sbr.rel (0) target = $region17
    $region16: #{tpu_custom_call.1} parent=1 // pred_region
      %s188 = ssub.s32 1792, 1792
      %189 = vsyncadd [#allocation3], %s188
      %s190 = sshll.u32 [#allocation2], 4
      %s191 = int_to_ptr.vmem [resolvable:$true] %s190
      %196 = dma.vmem_to_hbm [thread:$0]  %s191, 1792, %s3, [#allocation3], 256, 256, 16
    $region17: #{tpu_custom_call.1} parent=1 // pred_fallthru
      _
    // Predicated region
    $region18: #{tpu_custom_call.1} parent=1 // pred_check
      _
    $region19: #{tpu_custom_call.1} parent=1 // pred_check_branch
      %198 = sbr.rel (0) target = $region21
    $region20: #{tpu_custom_call.1} parent=1 // pred_region
      %199 = dma.done [#allocation3], 1792
    $region21: #{tpu_custom_call.1} parent=1 // pred_fallthru
      _
    %200 = vsyncpa [#allocation3], 1

</llo_original>
